<compile_context>
chip_gen: v6e
topology: v6e:2x2x1
jax: 0.10.0
libtpu: 0.0.40
codegen_flags: <defaults>
</compile_context>

<pallas_src>
import functools

import jax
import jax.numpy as jnp
from jax.experimental import pallas as pl
from jax.experimental.pallas import tpu as pltpu


# ---------------------------------------------------------------------------
# Kernel 1: batch-invariant Gaussian attention maps, computed exactly once.
# ---------------------------------------------------------------------------
def _att_kernel(coords_ref, mu_ref, ls_ref, att_ref):
    """coords: (2, S) [row 0 = y, row 1 = x], mu/ls: (K, 2), att out: (K, S)."""
    yy = coords_ref[0:1, :]                            # (1, S)
    xx = coords_ref[1:2, :]                            # (1, S)
    inv_sig = jnp.exp(-ls_ref[...])                    # (K, 2): 1/sigma, no divides
    dy = (yy - mu_ref[:, 0:1]) * inv_sig[:, 0:1]       # (K, S)
    dx = (xx - mu_ref[:, 1:2]) * inv_sig[:, 1:2]       # (K, S)
    z = -0.5 * (dy * dy + dx * dx)                     # (K, S)
    z = z - jnp.max(z, axis=-1, keepdims=True)         # stability: avoid 0/0 NaN
    e = jnp.exp(z)
    # Exact spatial normalization (one-time cost; keeps probs accurate).
    att_ref[...] = e / jnp.sum(e, axis=-1, keepdims=True)


def _attention_maps_call(coords, mu, log_sigma):
    K = mu.shape[0]
    S = coords.shape[1]
    # Tiny problem -> no grid; full arrays live in VMEM.
    # TODO(synk): if only used for visualization, emit bf16 to halve writeback.
    return pl.pallas_call(
        _att_kernel,
        out_shape=jax.ShapeDtypeStruct((K, S), jnp.float32),
    )(coords, mu, log_sigma)


# ---------------------------------------------------------------------------
# Kernel 2: feature module + attention pooling + cluster softmax, TB samples
# per grid step.
# ---------------------------------------------------------------------------
def _make_main_kernel(tb, c_in):
    def kernel(att_ref, x_ref, wt_ref, cb_ref, proto_ref, pb_ref, probs_ref):
        """Shapes per grid step:
          att   : (K, S)         constant, resident across the grid
          x     : (TB, C_in, S)  this step's samples, channels on sublanes
          wt    : (C_feat, C_in) 1x1 conv weight (pre-transposed)
          cb    : (C_feat, 1)    conv bias
          proto : (K, C_feat)    cluster prototypes (pre-transposed)
          pb    : (K, 1)         cluster logit bias
          probs : (TB, K, 1)     out: softmax cluster probabilities
        """
        att = att_ref[...]                              # (K, S)
        wt = wt_ref[...]                                # (C_feat, C_in)
        cb = cb_ref[...]                                # (C_feat, 1)
        proto = proto_ref[...]                          # (K, C_feat)
        pb = pb_ref[...]                                # (K, 1)
        for t in range(tb):                             # TB small; static unroll
            x = x_ref[t]                                # (C_in, S)
            # 1x1 conv as C_in unrolled VPU broadcast-FMAs (MXU would pad 4->256).
            acc = wt[:, 0:1] * x[0:1, :]                # (C_feat, S)
            for c in range(1, c_in):
                acc = acc + wt[:, c:c + 1] * x[c:c + 1, :]
            feat = jnp.maximum(acc + cb, 0.0)           # (C_feat, S)
            # Attention pooling: MXU contraction over S (lane-dense operands).
            pooled = jax.lax.dot_general(
                att, feat, (((1,), (1,)), ((), ())),
                preferred_element_type=jnp.float32)     # (K, C_feat)
            # Cluster logits: elementwise mul + lane reduce (no transpose).
            logits = jnp.sum(pooled * proto, axis=-1, keepdims=True) + pb  # (K, 1)
            m = jnp.max(logits, axis=0, keepdims=True)
            p = jnp.exp(logits - m)
            probs_ref[t] = p / jnp.sum(p, axis=0, keepdims=True)  # exact denom
    return kernel


def gaussian_attention_cluster_call(x_bcs, att, conv_w, conv_b, proto,
                                    proto_bias, tb):
    B, C_in, S = x_bcs.shape
    C_feat = conv_w.shape[0]
    K = proto.shape[0]
    assert B % tb == 0
    probs = pl.pallas_call(
        _make_main_kernel(tb, C_in),
        out_shape=jax.ShapeDtypeStruct((B, K, 1), jnp.float32),
        grid=(B // tb,),
        in_specs=[
            pl.BlockSpec((K, S), lambda b: (0, 0)),          # att (resident)
            pl.BlockSpec((tb, C_in, S), lambda b: (b, 0, 0)),  # x (this step)
            pl.BlockSpec((C_feat, C_in), lambda b: (0, 0)),  # conv weight
            pl.BlockSpec((C_feat, 1), lambda b: (0, 0)),     # conv bias
            pl.BlockSpec((K, C_feat), lambda b: (0, 0)),     # prototypes
            pl.BlockSpec((K, 1), lambda b: (0, 0)),          # proto bias
        ],
        out_specs=pl.BlockSpec((tb, K, 1), lambda b: (b, 0, 0)),
        compiler_params=pltpu.CompilerParams(
            dimension_semantics=("parallel",),
            vmem_limit_bytes=32 * 1024 * 1024),
    )(att, x_bcs, conv_w, conv_b, proto, proto_bias)
    return probs[:, :, 0]                                    # (B, K)


# ---------------------------------------------------------------------------
# Module wrapper: parameter init + layout plumbing + forward_test.
# ---------------------------------------------------------------------------
def init_params(key, c_in, c_feat, K, H, W):
    k1, k2, k3, k4 = jax.random.split(key, 4)
    mu_y = jax.random.uniform(k2, (K, 1), jnp.float32) * (H - 1.0)
    mu_x = jax.random.uniform(k4, (K, 1), jnp.float32) * (W - 1.0)
    return {
        # layouts chosen so the kernel never transposes:
        "conv_w": jax.random.normal(k1, (c_feat, c_in), jnp.float32) * 0.1,
        "conv_b": jnp.zeros((c_feat, 1), jnp.float32),
        "mu": jnp.concatenate([mu_y, mu_x], axis=1),                  # (K, 2)
        "log_sigma": jnp.concatenate(
            [jnp.full((K, 1), jnp.log(H / 4.0), jnp.float32),
             jnp.full((K, 1), jnp.log(W / 4.0), jnp.float32)], axis=1),
        "proto": jax.random.normal(k3, (K, c_feat), jnp.float32) * 0.1,
        "proto_bias": jnp.zeros((K, 1), jnp.float32),
    }


def _pick_tb(B):
    for cand in (8, 4, 2, 1):
        if B % cand == 0:
            return cand
    return 1


@functools.partial(jax.jit, static_argnames=("return_target", "return_att_map"))
def gaussian_attention_cluster_forward(x_nchw, params,
                                       return_target=False,
                                       return_att_map=False):
    B, C_in, H, W = x_nchw.shape
    S = H * W
    # NO transpose: (B, C_in, H, W) -> (B, C_in, S) is a free reshape.
    x_bcs = x_nchw.reshape(B, C_in, S)
    # constant spatial coordinate grid (row 0 = y, row 1 = x); compile-time const
    coords = jnp.stack(
        [jnp.repeat(jnp.arange(H, dtype=jnp.float32), W),
         jnp.tile(jnp.arange(W, dtype=jnp.float32), H)], axis=0)      # (2, S)

    # Attention maps are input-independent: computed ONCE, not per batch step.
    att = _attention_maps_call(coords, params["mu"], params["log_sigma"])  # (K, S)

    probs = gaussian_attention_cluster_call(
        x_bcs, att, params["conv_w"], params["conv_b"], params["proto"],
        params["proto_bias"], _pick_tb(B))

    outputs = {"cluster_probs": probs}                         # (B, K)
    if return_target:
        outputs["target"] = jnp.argmax(probs, axis=-1)         # (B,)
    if return_att_map:
        K = att.shape[0]
        outputs["att_map"] = att.reshape(K, H, W)              # (K, H, W)
    return outputs


# ---------------------------------------------------------------------------
# Pure-JAX reference of the same forward math (for correctness checking).
# ---------------------------------------------------------------------------
def _reference_forward(x_nchw, params):
    B, C_in, H, W = x_nchw.shape
    S = H * W
    x = x_nchw.reshape(B, C_in, S)
    feat = jnp.maximum(
        jnp.einsum("fc,bcs->bfs", params["conv_w"], x) + params["conv_b"][None],
        0.0)                                                    # (B, C_feat, S)
    ys = jnp.repeat(jnp.arange(H, dtype=jnp.float32), W)
    xs = jnp.tile(jnp.arange(W, dtype=jnp.float32), H)
    sig = jnp.exp(params["log_sigma"])                          # (K, 2)
    dy = (ys[None, :] - params["mu"][:, 0:1]) / sig[:, 0:1]     # (K, S)
    dx = (xs[None, :] - params["mu"][:, 1:2]) / sig[:, 1:2]
    att = jax.nn.softmax(-0.5 * (dy * dy + dx * dx), axis=-1)   # (K, S)
    pooled = jnp.einsum("ks,bfs->bkf", att, feat)               # (B, K, C_feat)
    logits = (jnp.sum(pooled * params["proto"][None], axis=-1)
              + params["proto_bias"][:, 0][None])               # (B, K)
    return jax.nn.softmax(logits, axis=-1), att


if __name__ == "__main__":
    B, C_in, H, W = 2, 4, 16, 16
    C_feat, K = 32, 8

    root = jax.random.PRNGKey(0)
    k_params, k_x = jax.random.split(root)
    params = init_params(k_params, C_in, C_feat, K, H, W)
    x = jax.random.normal(k_x, (B, C_in, H, W), jnp.float32)

    out = gaussian_attention_cluster_forward(
        x, params, return_target=True, return_att_map=True)
    out = jax.block_until_ready(out)

    assert out["cluster_probs"].shape == (B, K)
    assert out["target"].shape == (B,)
    assert out["att_map"].shape == (K, H, W)
    assert bool(jnp.all(jnp.isfinite(out["cluster_probs"])))
    assert bool(jnp.all(jnp.isfinite(out["att_map"])))

    # sanity: softmax rows / spatially-normalized maps sum to ~1 (exact divides)
    assert jnp.allclose(jnp.sum(out["cluster_probs"], axis=-1), 1.0, atol=1e-3)
    assert jnp.allclose(jnp.sum(out["att_map"], axis=(1, 2)), 1.0, atol=1e-3)

    # compare against the pure-JAX reference of the same forward math
    # (loose tolerance absorbs MXU default-precision differences vs XLA einsum)
    ref_probs, ref_att = _reference_forward(x, params)
    assert jnp.allclose(out["cluster_probs"], ref_probs, rtol=2e-2, atol=2e-2)
    assert jnp.allclose(out["att_map"].reshape(K, H * W), ref_att,
                        rtol=2e-2, atol=2e-2)

    print("KERNEL_OK")
</pallas_src>

<mosaic_0001>
module attributes {stable_mosaic.version = 11 : i64} {
  func.func @_att_kernel(%arg0: memref<2x256xf32, #tpu.memory_space<vmem>>, %arg1: memref<8x2xf32, #tpu.memory_space<vmem>>, %arg2: memref<8x2xf32, #tpu.memory_space<vmem>>, %arg3: memref<8x256xf32, #tpu.memory_space<vmem>>) attributes {dimension_semantics = [], scalar_prefetch = 0 : i64, scratch_operands = 0 : i64, tpu.core_type = #tpu.core_type<tc>} {
    %c0 = arith.constant 0 : index
    %c0_0 = arith.constant 0 : index
    %0 = vector.load %arg0[%c0, %c0_0] : memref<2x256xf32, #tpu.memory_space<vmem>>, vector<1x256xf32>
    %c1 = arith.constant 1 : index
    %c0_1 = arith.constant 0 : index
    %1 = vector.load %arg0[%c1, %c0_1] : memref<2x256xf32, #tpu.memory_space<vmem>>, vector<1x256xf32>
    %c0_2 = arith.constant 0 : index
    %c0_3 = arith.constant 0 : index
    %2 = vector.load %arg2[%c0_2, %c0_3] : memref<8x2xf32, #tpu.memory_space<vmem>>, vector<8x2xf32>
    %cst = arith.constant 0.000000e+00 : f32
    %3 = vector.broadcast %cst : f32 to vector<8x2xf32>
    %4 = arith.subf %3, %2 : vector<8x2xf32>
    %5 = math.exp %4 : vector<8x2xf32>
    %c0_4 = arith.constant 0 : index
    %c0_5 = arith.constant 0 : index
    %6 = vector.load %arg1[%c0_4, %c0_5] : memref<8x2xf32, #tpu.memory_space<vmem>>, vector<8x1xf32>
    %7 = vector.broadcast %0 : vector<1x256xf32> to vector<8x256xf32>
    %8 = vector.broadcast %6 : vector<8x1xf32> to vector<8x256xf32>
    %9 = arith.subf %7, %8 : vector<8x256xf32>
    %10 = vector.extract_strided_slice %5 {offsets = [0, 0], sizes = [8, 1], strides = [1, 1]} : vector<8x2xf32> to vector<8x1xf32>
    %11 = vector.broadcast %10 : vector<8x1xf32> to vector<8x256xf32>
    %12 = arith.mulf %9, %11 : vector<8x256xf32>
    %c0_6 = arith.constant 0 : index
    %c1_7 = arith.constant 1 : index
    %13 = vector.load %arg1[%c0_6, %c1_7] : memref<8x2xf32, #tpu.memory_space<vmem>>, vector<8x1xf32>
    %14 = vector.broadcast %1 : vector<1x256xf32> to vector<8x256xf32>
    %15 = vector.broadcast %13 : vector<8x1xf32> to vector<8x256xf32>
    %16 = arith.subf %14, %15 : vector<8x256xf32>
    %17 = vector.extract_strided_slice %5 {offsets = [0, 1], sizes = [8, 1], strides = [1, 1]} : vector<8x2xf32> to vector<8x1xf32>
    %18 = vector.broadcast %17 : vector<8x1xf32> to vector<8x256xf32>
    %19 = arith.mulf %16, %18 : vector<8x256xf32>
    %20 = arith.mulf %12, %12 : vector<8x256xf32>
    %21 = arith.mulf %19, %19 : vector<8x256xf32>
    %22 = arith.addf %20, %21 : vector<8x256xf32>
    %cst_8 = arith.constant -5.000000e-01 : f32
    %23 = vector.broadcast %cst_8 : f32 to vector<8x256xf32>
    %24 = arith.mulf %23, %22 : vector<8x256xf32>
    %cst_9 = arith.constant dense<0xFF800000> : vector<8xf32>
    %25 = vector.multi_reduction <maximumf>, %24, %cst_9 [1] : vector<8x256xf32> to vector<8xf32>
    %26 = vector.shape_cast %25 : vector<8xf32> to vector<8x1xf32>
    %27 = vector.broadcast %26 : vector<8x1xf32> to vector<8x256xf32>
    %28 = arith.subf %24, %27 : vector<8x256xf32>
    %29 = math.exp %28 : vector<8x256xf32>
    %cst_10 = arith.constant dense<0.000000e+00> : vector<8xf32>
    %30 = vector.multi_reduction <add>, %29, %cst_10 [1] : vector<8x256xf32> to vector<8xf32>
    %31 = vector.shape_cast %30 : vector<8xf32> to vector<8x1xf32>
    %32 = vector.broadcast %31 : vector<8x1xf32> to vector<8x256xf32>
    %33 = arith.divf %29, %32 : vector<8x256xf32>
    %c0_11 = arith.constant 0 : index
    %c0_12 = arith.constant 0 : index
    %34 = vector.load %arg3[%c0_11, %c0_12] : memref<8x256xf32, #tpu.memory_space<vmem>>, vector<8x256xf32>
    tpu.vector_store %arg3[%c0_11, %c0_12], %33 {strides = array<i32>} : memref<8x256xf32, #tpu.memory_space<vmem>>, vector<8x256xf32>,
    return
  }
}

module attributes {stable_mosaic.version = 11 : i64} {
  func.func @kernel(%arg0: i32, %arg1: memref<8x256xf32, #tpu.memory_space<vmem>>, %arg2: memref<2x4x256xf32, #tpu.memory_space<vmem>>, %arg3: memref<32x4xf32, #tpu.memory_space<vmem>>, %arg4: memref<32x1xf32, #tpu.memory_space<vmem>>, %arg5: memref<8x32xf32, #tpu.memory_space<vmem>>, %arg6: memref<8x1xf32, #tpu.memory_space<vmem>>, %arg7: memref<2x8x1xf32, #tpu.memory_space<vmem>>) attributes {dimension_semantics = [#tpu.dimension_semantics<parallel>], iteration_bounds = array<i64: 1>, scalar_prefetch = 0 : i64, scratch_operands = 0 : i64, tpu.core_type = #tpu.core_type<tc>, window_params = [{pipeline_mode = #tpu.pipeline_mode<synchronous>, transform_indices = @transform_0, window_bounds = array<i64: 8, 256>}, {transform_indices = @transform_1, window_bounds = array<i64: 2, 4, 256>}, {pipeline_mode = #tpu.pipeline_mode<synchronous>, transform_indices = @transform_2, window_bounds = array<i64: 32, 4>}, {pipeline_mode = #tpu.pipeline_mode<synchronous>, transform_indices = @transform_3, window_bounds = array<i64: 32, 1>}, {pipeline_mode = #tpu.pipeline_mode<synchronous>, transform_indices = @transform_4, window_bounds = array<i64: 8, 32>}, {pipeline_mode = #tpu.pipeline_mode<synchronous>, transform_indices = @transform_5, window_bounds = array<i64: 8, 1>}, {transform_indices = @transform_6, window_bounds = array<i64: 2, 8, 1>}]} {
    %c0 = arith.constant 0 : index
    %c0_0 = arith.constant 0 : index
    %0 = vector.load %arg1[%c0, %c0_0] : memref<8x256xf32, #tpu.memory_space<vmem>>, vector<8x256xf32>
    %c0_1 = arith.constant 0 : index
    %c0_2 = arith.constant 0 : index
    %1 = vector.load %arg3[%c0_1, %c0_2] : memref<32x4xf32, #tpu.memory_space<vmem>>, vector<32x4xf32>
    %c0_3 = arith.constant 0 : index
    %c0_4 = arith.constant 0 : index
    %2 = vector.load %arg4[%c0_3, %c0_4] : memref<32x1xf32, #tpu.memory_space<vmem>>, vector<32x1xf32>
    %c0_5 = arith.constant 0 : index
    %c0_6 = arith.constant 0 : index
    %3 = vector.load %arg5[%c0_5, %c0_6] : memref<8x32xf32, #tpu.memory_space<vmem>>, vector<8x32xf32>
    %c0_7 = arith.constant 0 : index
    %c0_8 = arith.constant 0 : index
    %4 = vector.load %arg6[%c0_7, %c0_8] : memref<8x1xf32, #tpu.memory_space<vmem>>, vector<8x1xf32>
    %c0_9 = arith.constant 0 : index
    %c0_10 = arith.constant 0 : index
    %c0_11 = arith.constant 0 : index
    %5 = vector.load %arg2[%c0_9, %c0_10, %c0_11] : memref<2x4x256xf32, #tpu.memory_space<vmem>>, vector<1x4x256xf32>
    %6 = vector.shape_cast %5 : vector<1x4x256xf32> to vector<4x256xf32>
    %7 = vector.extract_strided_slice %1 {offsets = [0, 0], sizes = [32, 1], strides = [1, 1]} : vector<32x4xf32> to vector<32x1xf32>
    %8 = vector.extract_strided_slice %6 {offsets = [0, 0], sizes = [1, 256], strides = [1, 1]} : vector<4x256xf32> to vector<1x256xf32>
    %9 = vector.broadcast %7 : vector<32x1xf32> to vector<32x256xf32>
    %10 = vector.broadcast %8 : vector<1x256xf32> to vector<32x256xf32>
    %11 = arith.mulf %9, %10 : vector<32x256xf32>
    %12 = vector.extract_strided_slice %1 {offsets = [0, 1], sizes = [32, 1], strides = [1, 1]} : vector<32x4xf32> to vector<32x1xf32>
    %13 = vector.extract_strided_slice %6 {offsets = [1, 0], sizes = [1, 256], strides = [1, 1]} : vector<4x256xf32> to vector<1x256xf32>
    %14 = vector.broadcast %12 : vector<32x1xf32> to vector<32x256xf32>
    %15 = vector.broadcast %13 : vector<1x256xf32> to vector<32x256xf32>
    %16 = arith.mulf %14, %15 : vector<32x256xf32>
    %17 = arith.addf %11, %16 : vector<32x256xf32>
    %18 = vector.extract_strided_slice %1 {offsets = [0, 2], sizes = [32, 1], strides = [1, 1]} : vector<32x4xf32> to vector<32x1xf32>
    %19 = vector.extract_strided_slice %6 {offsets = [2, 0], sizes = [1, 256], strides = [1, 1]} : vector<4x256xf32> to vector<1x256xf32>
    %20 = vector.broadcast %18 : vector<32x1xf32> to vector<32x256xf32>
    %21 = vector.broadcast %19 : vector<1x256xf32> to vector<32x256xf32>
    %22 = arith.mulf %20, %21 : vector<32x256xf32>
    %23 = arith.addf %17, %22 : vector<32x256xf32>
    %24 = vector.extract_strided_slice %1 {offsets = [0, 3], sizes = [32, 1], strides = [1, 1]} : vector<32x4xf32> to vector<32x1xf32>
    %25 = vector.extract_strided_slice %6 {offsets = [3, 0], sizes = [1, 256], strides = [1, 1]} : vector<4x256xf32> to vector<1x256xf32>
    %26 = vector.broadcast %24 : vector<32x1xf32> to vector<32x256xf32>
    %27 = vector.broadcast %25 : vector<1x256xf32> to vector<32x256xf32>
    %28 = arith.mulf %26, %27 : vector<32x256xf32>
    %29 = arith.addf %23, %28 : vector<32x256xf32>
    %30 = vector.broadcast %2 : vector<32x1xf32> to vector<32x256xf32>
    %31 = arith.addf %29, %30 : vector<32x256xf32>
    %cst = arith.constant 0.000000e+00 : f32
    %32 = vector.broadcast %cst : f32 to vector<32x256xf32>
    %33 = arith.maximumf %31, %32 : vector<32x256xf32>
    %cst_12 = arith.constant dense<0.000000e+00> : vector<8x32xf32>
    %34 = tpu.matmul %0, %33, %cst_12 {dimension_numbers = #tpu.dot_dimension_numbers<[1], [1], [0], [0], [0, 0, 1, 0], [], []>} : vector<8x256xf32>, vector<32x256xf32>, vector<8x32xf32> -> vector<8x32xf32>
    %35 = arith.mulf %34, %3 : vector<8x32xf32>
    %cst_13 = arith.constant dense<0.000000e+00> : vector<8xf32>
    %36 = vector.multi_reduction <add>, %35, %cst_13 [1] : vector<8x32xf32> to vector<8xf32>
    %37 = vector.shape_cast %36 : vector<8xf32> to vector<8x1xf32>
    %38 = arith.addf %37, %4 : vector<8x1xf32>
    %cst_14 = arith.constant dense<0xFF800000> : vector<1xf32>
    %39 = vector.multi_reduction <maximumf>, %38, %cst_14 [0] : vector<8x1xf32> to vector<1xf32>
    %40 = vector.shape_cast %39 : vector<1xf32> to vector<1x1xf32>
    %41 = vector.broadcast %40 : vector<1x1xf32> to vector<8x1xf32>
    %42 = arith.subf %38, %41 : vector<8x1xf32>
    %43 = math.exp %42 : vector<8x1xf32>
    %cst_15 = arith.constant dense<0.000000e+00> : vector<1xf32>
    %44 = vector.multi_reduction <add>, %43, %cst_15 [0] : vector<8x1xf32> to vector<1xf32>
    %45 = vector.shape_cast %44 : vector<1xf32> to vector<1x1xf32>
    %46 = vector.broadcast %45 : vector<1x1xf32> to vector<8x1xf32>
    %47 = arith.divf %43, %46 : vector<8x1xf32>
    %c0_16 = arith.constant 0 : index
    %c0_17 = arith.constant 0 : index
    %c0_18 = arith.constant 0 : index
    %48 = vector.load %arg7[%c0_16, %c0_17, %c0_18] : memref<2x8x1xf32, #tpu.memory_space<vmem>>, vector<1x8x1xf32>
    %49 = vector.shape_cast %48 : vector<1x8x1xf32> to vector<8x1xf32>
    %50 = vector.shape_cast %47 : vector<8x1xf32> to vector<1x8x1xf32>
    tpu.vector_store %arg7[%c0_16, %c0_17, %c0_18], %50 {strides = array<i32>} : memref<2x8x1xf32, #tpu.memory_space<vmem>>, vector<1x8x1xf32>,
    %c1 = arith.constant 1 : index
    %c0_19 = arith.constant 0 : index
    %c0_20 = arith.constant 0 : index
    %51 = vector.load %arg2[%c1, %c0_19, %c0_20] : memref<2x4x256xf32, #tpu.memory_space<vmem>>, vector<1x4x256xf32>
    %52 = vector.shape_cast %51 : vector<1x4x256xf32> to vector<4x256xf32>
    %53 = vector.extract_strided_slice %1 {offsets = [0, 0], sizes = [32, 1], strides = [1, 1]} : vector<32x4xf32> to vector<32x1xf32>
    %54 = vector.extract_strided_slice %52 {offsets = [0, 0], sizes = [1, 256], strides = [1, 1]} : vector<4x256xf32> to vector<1x256xf32>
    %55 = vector.broadcast %53 : vector<32x1xf32> to vector<32x256xf32>
    %56 = vector.broadcast %54 : vector<1x256xf32> to vector<32x256xf32>
    %57 = arith.mulf %55, %56 : vector<32x256xf32>
    %58 = vector.extract_strided_slice %1 {offsets = [0, 1], sizes = [32, 1], strides = [1, 1]} : vector<32x4xf32> to vector<32x1xf32>
    %59 = vector.extract_strided_slice %52 {offsets = [1, 0], sizes = [1, 256], strides = [1, 1]} : vector<4x256xf32> to vector<1x256xf32>
    %60 = vector.broadcast %58 : vector<32x1xf32> to vector<32x256xf32>
    %61 = vector.broadcast %59 : vector<1x256xf32> to vector<32x256xf32>
    %62 = arith.mulf %60, %61 : vector<32x256xf32>
    %63 = arith.addf %57, %62 : vector<32x256xf32>
    %64 = vector.extract_strided_slice %1 {offsets = [0, 2], sizes = [32, 1], strides = [1, 1]} : vector<32x4xf32> to vector<32x1xf32>
    %65 = vector.extract_strided_slice %52 {offsets = [2, 0], sizes = [1, 256], strides = [1, 1]} : vector<4x256xf32> to vector<1x256xf32>
    %66 = vector.broadcast %64 : vector<32x1xf32> to vector<32x256xf32>
    %67 = vector.broadcast %65 : vector<1x256xf32> to vector<32x256xf32>
    %68 = arith.mulf %66, %67 : vector<32x256xf32>
    %69 = arith.addf %63, %68 : vector<32x256xf32>
    %70 = vector.extract_strided_slice %1 {offsets = [0, 3], sizes = [32, 1], strides = [1, 1]} : vector<32x4xf32> to vector<32x1xf32>
    %71 = vector.extract_strided_slice %52 {offsets = [3, 0], sizes = [1, 256], strides = [1, 1]} : vector<4x256xf32> to vector<1x256xf32>
    %72 = vector.broadcast %70 : vector<32x1xf32> to vector<32x256xf32>
    %73 = vector.broadcast %71 : vector<1x256xf32> to vector<32x256xf32>
    %74 = arith.mulf %72, %73 : vector<32x256xf32>
    %75 = arith.addf %69, %74 : vector<32x256xf32>
    %76 = vector.broadcast %2 : vector<32x1xf32> to vector<32x256xf32>
    %77 = arith.addf %75, %76 : vector<32x256xf32>
    %cst_21 = arith.constant 0.000000e+00 : f32
    %78 = vector.broadcast %cst_21 : f32 to vector<32x256xf32>
    %79 = arith.maximumf %77, %78 : vector<32x256xf32>
    %cst_22 = arith.constant dense<0.000000e+00> : vector<8x32xf32>
    %80 = tpu.matmul %0, %79, %cst_22 {dimension_numbers = #tpu.dot_dimension_numbers<[1], [1], [0], [0], [0, 0, 1, 0], [], []>} : vector<8x256xf32>, vector<32x256xf32>, vector<8x32xf32> -> vector<8x32xf32>
    %81 = arith.mulf %80, %3 : vector<8x32xf32>
    %cst_23 = arith.constant dense<0.000000e+00> : vector<8xf32>
    %82 = vector.multi_reduction <add>, %81, %cst_23 [1] : vector<8x32xf32> to vector<8xf32>
    %83 = vector.shape_cast %82 : vector<8xf32> to vector<8x1xf32>
    %84 = arith.addf %83, %4 : vector<8x1xf32>
    %cst_24 = arith.constant dense<0xFF800000> : vector<1xf32>
    %85 = vector.multi_reduction <maximumf>, %84, %cst_24 [0] : vector<8x1xf32> to vector<1xf32>
    %86 = vector.shape_cast %85 : vector<1xf32> to vector<1x1xf32>
    %87 = vector.broadcast %86 : vector<1x1xf32> to vector<8x1xf32>
    %88 = arith.subf %84, %87 : vector<8x1xf32>
    %89 = math.exp %88 : vector<8x1xf32>
    %cst_25 = arith.constant dense<0.000000e+00> : vector<1xf32>
    %90 = vector.multi_reduction <add>, %89, %cst_25 [0] : vector<8x1xf32> to vector<1xf32>
    %91 = vector.shape_cast %90 : vector<1xf32> to vector<1x1xf32>
    %92 = vector.broadcast %91 : vector<1x1xf32> to vector<8x1xf32>
    %93 = arith.divf %89, %92 : vector<8x1xf32>
    %c1_26 = arith.constant 1 : index
    %c0_27 = arith.constant 0 : index
    %c0_28 = arith.constant 0 : index
    %94 = vector.load %arg7[%c1_26, %c0_27, %c0_28] : memref<2x8x1xf32, #tpu.memory_space<vmem>>, vector<1x8x1xf32>
    %95 = vector.shape_cast %94 : vector<1x8x1xf32> to vector<8x1xf32>
    %96 = vector.shape_cast %93 : vector<8x1xf32> to vector<1x8x1xf32>
    tpu.vector_store %arg7[%c1_26, %c0_27, %c0_28], %96 {strides = array<i32>} : memref<2x8x1xf32, #tpu.memory_space<vmem>>, vector<1x8x1xf32>,
    return
  }
  func.func @transform_0(%arg0: i32) -> (i32, i32) {
    %c0_i32 = arith.constant 0 : i32
    %c0_i32_0 = arith.constant 0 : i32
    %c0_i32_1 = arith.constant 0 : i32
    return %c0_i32, %c0_i32_0 : i32, i32
  }
  func.func @transform_1(%arg0: i32) -> (i32, i32, i32) {
    %c0_i32 = arith.constant 0 : i32
    %c0_i32_0 = arith.constant 0 : i32
    %c0_i32_1 = arith.constant 0 : i32
    return %arg0, %c0_i32, %c0_i32_0 : i32, i32, i32
  }
  func.func @transform_2(%arg0: i32) -> (i32, i32) {
    %c0_i32 = arith.constant 0 : i32
    %c0_i32_0 = arith.constant 0 : i32
    %c0_i32_1 = arith.constant 0 : i32
    return %c0_i32, %c0_i32_0 : i32, i32
  }
  func.func @transform_3(%arg0: i32) -> (i32, i32) {
    %c0_i32 = arith.constant 0 : i32
    %c0_i32_0 = arith.constant 0 : i32
    %c0_i32_1 = arith.constant 0 : i32
    return %c0_i32, %c0_i32_0 : i32, i32
  }
  func.func @transform_4(%arg0: i32) -> (i32, i32) {
    %c0_i32 = arith.constant 0 : i32
    %c0_i32_0 = arith.constant 0 : i32
    %c0_i32_1 = arith.constant 0 : i32
    return %c0_i32, %c0_i32_0 : i32, i32
  }
  func.func @transform_5(%arg0: i32) -> (i32, i32) {
    %c0_i32 = arith.constant 0 : i32
    %c0_i32_0 = arith.constant 0 : i32
    %c0_i32_1 = arith.constant 0 : i32
    return %c0_i32, %c0_i32_0 : i32, i32
  }
  func.func @transform_6(%arg0: i32) -> (i32, i32, i32) {
    %c0_i32 = arith.constant 0 : i32
    %c0_i32_0 = arith.constant 0 : i32
    %c0_i32_1 = arith.constant 0 : i32
    return %arg0, %c0_i32, %c0_i32_0 : i32, i32, i32
  }
}

</mosaic_0001>

<llo_original>
// kernel: tile.9
$region0: #{tile.9}
  %s0 = inlined_call_operand.vmem [shape: f32[16,16], index: 0, kind: input, shape index: {}]
  %s1 = inlined_call_operand.vmem [shape: f32[1,256], index: 1, kind: output, shape index: {}]
  $region1: #{tile.9} parent=0
    #allocation0 [shape = 'u8[8192]{0}', space=vmem, size = 0x2000, scoped, tag = 'scoped mem for output reshape']
    %s2 = smov 3
    %v3 = vld [vmem:[%s0] ss:$8 sm:%s2]
    %vm4 = vcmask 130048
    %5 = vst.msk [vmem:[#allocation0] ss:$8 sm:$0x3] %vm4, %v3
    %s6 = scalar_lea.vmem %s0, 7
    %s7 = smov 3
    %v8 = vld [vmem:[%s6] ss:$8 sm:%s7]
    %9 = vrot.lane.b32.xlu0 %v8, 112
    %v10 = vpop.permute.xlu0 %9
    %vm11 = vcmask 1048448
    %12 = vst.msk [vmem:[#allocation0] ss:$8 sm:$0x3] %vm11, %v10
    %s13 = scalar_lea.vmem %s0, 6
    %s14 = smov 3
    %v15 = vld [vmem:[%s13] ss:$8 sm:%s14]
    %16 = vrot.lane.b32.xlu0 %v15, 96
    %v17 = vpop.permute.xlu0 %16
    %vm18 = vcmask 917248
    %19 = vst.msk [vmem:[#allocation0] ss:$8 sm:$0x3] %vm18, %v17
    %s20 = scalar_lea.vmem %s0, 5
    %s21 = smov 3
    %v22 = vld [vmem:[%s20] ss:$8 sm:%s21]
    %23 = vrot.lane.b32.xlu0 %v22, 80
    %v24 = vpop.permute.xlu0 %23
    %vm25 = vcmask 786048
    %26 = vst.msk [vmem:[#allocation0] ss:$8 sm:$0x3] %vm25, %v24
    %s27 = scalar_lea.vmem %s0, 4
    %s28 = smov 3
    %v29 = vld [vmem:[%s27] ss:$8 sm:%s28]
    %30 = vrot.lane.b32.xlu0 %v29, 64
    %v31 = vpop.permute.xlu0 %30
    %vm32 = vcmask 654848
    %33 = vst.msk [vmem:[#allocation0] ss:$8 sm:$0x3] %vm32, %v31
    %s34 = scalar_lea.vmem %s0, 3
    %s35 = smov 3
    %v36 = vld [vmem:[%s34] ss:$8 sm:%s35]
    %37 = vrot.lane.b32.xlu0 %v36, 48
    %v38 = vpop.permute.xlu0 %37
    %vm39 = vcmask 523648
    %40 = vst.msk [vmem:[#allocation0] ss:$8 sm:$0x3] %vm39, %v38
    %s41 = scalar_lea.vmem %s0, 2
    %s42 = smov 3
    %v43 = vld [vmem:[%s41] ss:$8 sm:%s42]
    %44 = vrot.lane.b32.xlu0 %v43, 32
    %v45 = vpop.permute.xlu0 %44
    %vm46 = vcmask 392448
    %47 = vst.msk [vmem:[#allocation0] ss:$8 sm:$0x3] %vm46, %v45
    %s48 = scalar_lea.vmem %s0, 1
    %s49 = smov 3
    %v50 = vld [vmem:[%s48] ss:$8 sm:%s49]
    %51 = vrot.lane.b32.xlu0 %v50, 16
    %v52 = vpop.permute.xlu0 %51
    %vm53 = vcmask 261248
    %54 = vst.msk [vmem:[#allocation0] ss:$8 sm:$0x3] %vm53, %v52
    %s56 = sshll.u32 1, 1
    %s57 = ssub.s32 %s56, 1
    %v59 = vld [vmem:[#allocation0] sm:%s57]
    %s60 = sshll.u32 1, 1
    %s61 = ssub.s32 %s60, 1
    %62 = vst [vmem:[%s1] sm:%s61] %v59
    %s63 = scalar_lea.vmem [#allocation0], 8
    %v64 = vld [vmem:[%s63] sm:%s57]
    %s65 = sshll.u32 1, 1
    %s66 = ssub.s32 %s65, 1
    %s67 = scalar_lea.vmem %s1, 1
    %68 = vst [vmem:[%s67] sm:%s66] %v64

// kernel: gaussian_attention_cluster_forward.2
$region0: #{gaussian_attention_cluster_forward.2}
  #allocation0 [shape = 'u32[]', space=smem, size = 0x4, offset = 0x4, fixed_abs, tag = 'smem constant byte address 0x4 - core index']
  #allocation1 [shape = 'u32[144,128]{1,0:T(1,128)}', space=vmem, size = 0x12000, scoped, tag = 'internal scratch']
  %s0 = inlined_call_operand.vmem [shape: f32[2,256], index: 0, kind: input, shape index: {}]
  %s1 = inlined_call_operand.vmem [shape: f32[8,2], index: 1, kind: input, shape index: {}]
  %s2 = inlined_call_operand.vmem [shape: f32[8,2], index: 2, kind: input, shape index: {}]
  %s3 = inlined_call_operand.vmem [shape: f32[8,256], index: 3, kind: output, shape index: {}]
  %s4 = sld [smem:[#allocation0]]
  $region22: #{gaussian_attention_cluster_forward.2} parent=0
    _
  %s6 = ssub.s32 1, %s4
  %s7 = scalar_select 0, %s6, %s4
  // Predicated region
  $region2: #{gaussian_attention_cluster_forward.2} parent=0 // pred_check
    _
  $region3: #{gaussian_attention_cluster_forward.2} parent=0 // pred_check_branch
    %9 = sbr.rel (0) target = $region5
  $region4: #{gaussian_attention_cluster_forward.2} parent=0 // pred_region
    _
  $region5: #{gaussian_attention_cluster_forward.2} parent=0 // pred_fallthru
    _
  // Predicated region
  $region6: #{gaussian_attention_cluster_forward.2} parent=0 // pred_check
    _
  $region7: #{gaussian_attention_cluster_forward.2} parent=0 // pred_check_branch
    %11 = sbr.rel (0) target = $region9
  $region8: #{gaussian_attention_cluster_forward.2} parent=0 // pred_region
    _
  $region9: #{gaussian_attention_cluster_forward.2} parent=0 // pred_fallthru
    _
  // Predicated region
  $region10: #{gaussian_attention_cluster_forward.2} parent=0 // pred_check
    _
  $region11: #{gaussian_attention_cluster_forward.2} parent=0 // pred_check_branch
    %13 = sbr.rel (0) target = $region13
  $region12: #{gaussian_attention_cluster_forward.2} parent=0 // pred_region
    _
  $region13: #{gaussian_attention_cluster_forward.2} parent=0 // pred_fallthru
    _
  %v14 = vld [vmem:[%s0] ss:$2 sm:$0x3]
  %s15 = scalar_lea.vmem %s0, 1
  %v16 = vld [vmem:[%s15] ss:$2 sm:$0x3]
  %v17 = vld [vmem:[%s2] sm:$0xff]
  %v18 = vsub.f32 0.0, %v17
  %v19 = vmul.f32 %v18, 1.442695
  %v20 = vpow.pop %v19
  %v21 = vld [vmem:[%s1] sm:$0xff]
  %v23 = vlaneseq
  %v24 = vshrl.u32 %v23, 7
  %v25 = vsub.s32 0, %v24
  %v26 = vrot.slane %v14, %v25
  %v27 = vlaneseq
  %v28 = vshrl.u32 %v27, 7
  %v29 = vsub.s32 1, %v28
  %v30 = vrot.slane %v14, %v29
  %34 = vset.pattern.permute.xlu0 0
  %35 = vperm.xlu0 %34, %v21
  %v36 = vpop.permute.xlu0 %35
  %v38 = vsub.f32 %v26, %v36
  %v39 = vsub.f32 %v30, %v36
  %41 = vset.pattern.permute.xlu0 0
  %42 = vperm.xlu0 %41, %v20
  %v43 = vpop.permute.xlu0 %42
  %v45 = vmul.f32 %v38, %v43
  %v46 = vmul.f32 %v39, %v43
  %v48 = vlaneseq
  %v49 = vshrl.u32 %v48, 7
  %v50 = vsub.s32 0, %v49
  %v51 = vrot.slane %v16, %v50
  %v52 = vlaneseq
  %v53 = vshrl.u32 %v52, 7
  %v54 = vsub.s32 1, %v53
  %v55 = vrot.slane %v16, %v54
  %58 = vset.pattern.permute.xlu0 1
  %59 = vperm.xlu0 %58, %v21
  %v60 = vpop.permute.xlu0 %59
  %v62 = vsub.f32 %v51, %v60
  %v63 = vsub.f32 %v55, %v60
  %64 = vset.pattern.permute.xlu0 1
  %65 = vperm.xlu0 %64, %v20
  %v66 = vpop.permute.xlu0 %65
  %v68 = vmul.f32 %v62, %v66
  %v69 = vmul.f32 %v63, %v66
  %v70 = vmul.f32 %v45, %v45
  %v71 = vmul.f32 %v46, %v46
  %v72 = vmul.f32 %v68, %v68
  %v73 = vmul.f32 %v69, %v69
  %v74 = vadd.f32 %v70, %v72
  %v75 = vadd.f32 %v71, %v73
  %v76 = vmul.f32 %v74, -0.5
  %v77 = vmul.f32 %v75, -0.5
  %v78 = vmax.f32 %v76, %v77
  %79 = vmax.xlane.f32.xlu0 %v78
  %v80 = vpop.xlane.xlu0 %79
  %v81 = vsub.f32 %v76, %v80
  %v82 = vsub.f32 %v77, %v80
  %v83 = vmul.f32 %v81, 1.442695
  %v84 = vpow.pop %v83
  %v85 = vmul.f32 %v82, 1.442695
  %v86 = vpow.pop %v85
  %v87 = vadd.f32 %v84, %v86
  %88 = vadd.xlane.f32.xlu0 %v87
  %v89 = vpop.xlane.xlu0 %88
  %v90 = vrcp.pop %v89
  %v91 = vmul.f32 %v84, %v90
  %v92 = vmul.f32 %v86, %v90
  %93 = vst [vmem:[%s3] sm:$0xff] %v91
  %94 = vst [vmem:[%s3 + $0x8] sm:$0xff] %v92
  // Predicated region
  $region14: #{gaussian_attention_cluster_forward.2} parent=0 // pred_check
    _
  $region15: #{gaussian_attention_cluster_forward.2} parent=0 // pred_check_branch
    %96 = sbr.rel (0) target = $region17
  $region16: #{gaussian_attention_cluster_forward.2} parent=0 // pred_region
    _
  $region17: #{gaussian_attention_cluster_forward.2} parent=0 // pred_fallthru
    _
  // Predicated region
  $region18: #{gaussian_attention_cluster_forward.2} parent=0 // pred_check
    _
  $region19: #{gaussian_attention_cluster_forward.2} parent=0 // pred_check_branch
    %98 = sbr.rel (0) target = $region21
  $region20: #{gaussian_attention_cluster_forward.2} parent=0 // pred_region
    _
  $region21: #{gaussian_attention_cluster_forward.2} parent=0 // pred_fallthru
    _

// kernel: gaussian_attention_cluster_forward.3
$region0: #{gaussian_attention_cluster_forward.3}
  #allocation0 [shape = 'u32[]', space=smem, size = 0x4, offset = 0x4, fixed_abs, tag = 'smem constant byte address 0x4 - core index']
  #allocation1 [shape = 'u32[144,128]{1,0:T(1,128)}', space=vmem, size = 0x12000, scoped, tag = 'internal scratch']
  %s0 = inlined_call_operand.vmem [shape: f32[8,256], index: 0, kind: input, shape index: {}]
  %s1 = inlined_call_operand.vmem [shape: f32[2,4,256], index: 1, kind: input, shape index: {}]
  %s2 = inlined_call_operand.vmem [shape: f32[32,4], index: 2, kind: input, shape index: {}]
  %s3 = inlined_call_operand.vmem [shape: f32[32,1], index: 3, kind: input, shape index: {}]
  %s4 = inlined_call_operand.vmem [shape: f32[8,32], index: 4, kind: input, shape index: {}]
  %s5 = inlined_call_operand.vmem [shape: f32[8,1], index: 5, kind: input, shape index: {}]
  %s6 = inlined_call_operand.vmem [shape: f32[2,8,1], index: 6, kind: output, shape index: {}]
  %s7 = sld [smem:[#allocation0]]
  $region34: #{gaussian_attention_cluster_forward.3} parent=0
    _
  %s9 = ssub.s32 1, %s7
  %s10 = scalar_select 0, %s9, %s7
  // Predicated region
  $region2: #{gaussian_attention_cluster_forward.3} parent=0 // pred_check
    _
  $region3: #{gaussian_attention_cluster_forward.3} parent=0 // pred_check_branch
    %12 = sbr.rel (0) target = $region5
  $region4: #{gaussian_attention_cluster_forward.3} parent=0 // pred_region
    _
  $region5: #{gaussian_attention_cluster_forward.3} parent=0 // pred_fallthru
    _
  // Predicated region
  $region6: #{gaussian_attention_cluster_forward.3} parent=0 // pred_check
    _
  $region7: #{gaussian_attention_cluster_forward.3} parent=0 // pred_check_branch
    %14 = sbr.rel (0) target = $region9
  $region8: #{gaussian_attention_cluster_forward.3} parent=0 // pred_region
    _
  $region9: #{gaussian_attention_cluster_forward.3} parent=0 // pred_fallthru
    _
  // Predicated region
  $region10: #{gaussian_attention_cluster_forward.3} parent=0 // pred_check
    _
  $region11: #{gaussian_attention_cluster_forward.3} parent=0 // pred_check_branch
    %16 = sbr.rel (0) target = $region13
  $region12: #{gaussian_attention_cluster_forward.3} parent=0 // pred_region
    _
  $region13: #{gaussian_attention_cluster_forward.3} parent=0 // pred_fallthru
    _
  // Predicated region
  $region14: #{gaussian_attention_cluster_forward.3} parent=0 // pred_check
    _
  $region15: #{gaussian_attention_cluster_forward.3} parent=0 // pred_check_branch
    %18 = sbr.rel (0) target = $region17
  $region16: #{gaussian_attention_cluster_forward.3} parent=0 // pred_region
    _
  $region17: #{gaussian_attention_cluster_forward.3} parent=0 // pred_fallthru
    _
  // Predicated region
  $region18: #{gaussian_attention_cluster_forward.3} parent=0 // pred_check
    _
  $region19: #{gaussian_attention_cluster_forward.3} parent=0 // pred_check_branch
    %20 = sbr.rel (0) target = $region21
  $region20: #{gaussian_attention_cluster_forward.3} parent=0 // pred_region
    _
  $region21: #{gaussian_attention_cluster_forward.3} parent=0 // pred_fallthru
    _
  // Predicated region
  $region22: #{gaussian_attention_cluster_forward.3} parent=0 // pred_check
    _
  $region23: #{gaussian_attention_cluster_forward.3} parent=0 // pred_check_branch
    %22 = sbr.rel (0) target = $region25
  $region24: #{gaussian_attention_cluster_forward.3} parent=0 // pred_region
    _
  $region25: #{gaussian_attention_cluster_forward.3} parent=0 // pred_fallthru
    _
  %v23 = vld [vmem:[%s0] sm:$0xff]
  %v24 = vld [vmem:[%s0 + $0x8] sm:$0xff]
  %v25 = vld [vmem:[%s2] sm:$0xff]
  %v26 = vld [vmem:[%s2 + $0x8] sm:$0xff]
  %v27 = vld [vmem:[%s2 + $0x10] sm:$0xff]
  %v28 = vld [vmem:[%s2 + $0x18] sm:$0xff]
  %v29 = vld [vmem:[%s3] sm:$0xff]
  %v30 = vld [vmem:[%s3 + $0x8] sm:$0xff]
  %v31 = vld [vmem:[%s3 + $0x10] sm:$0xff]
  %v32 = vld [vmem:[%s3 + $0x18] sm:$0xff]
  %v33 = vld [vmem:[%s4] sm:$0xff]
  %v34 = vld [vmem:[%s5] sm:$0xff]
  %v35 = vld [vmem:[%s1] sm:$0xff]
  %37 = vset.pattern.permute.xlu0 0
  %38 = vperm.xlu0 %37, %v25
  %v39 = vpop.permute.xlu0 %38
  %42 = vset.pattern.permute.xlu0 0
  %43 = vperm.xlu0 %42, %v26
  %v44 = vpop.permute.xlu0 %43
  %47 = vset.pattern.permute.xlu0 0
  %48 = vperm.xlu0 %47, %v27
  %v49 = vpop.permute.xlu0 %48
  %52 = vset.pattern.permute.xlu0 0
  %53 = vperm.xlu0 %52, %v28
  %v54 = vpop.permute.xlu0 %53
  %v57 = vlaneseq
  %v58 = vshrl.u32 %v57, 7
  %v59 = vsub.s32 0, %v58
  %v60 = vrot.slane %v35, %v59
  %v61 = vlaneseq
  %v62 = vshrl.u32 %v61, 7
  %v63 = vsub.s32 4, %v62
  %v64 = vrot.slane %v35, %v63
  %v67 = vlaneseq
  %v68 = vshrl.u32 %v67, 7
  %v69 = vsub.s32 0, %v68
  %v70 = vrot.slane %v60, %v69
  %v71 = vlaneseq
  %v72 = vshrl.u32 %v71, 7
  %v73 = vsub.s32 0, %v72
  %v74 = vrot.slane %v64, %v73
  %v75 = vmul.f32 %v39, %v70
  %v76 = vmul.f32 %v39, %v74
  %v77 = vmul.f32 %v44, %v70
  %v78 = vmul.f32 %v44, %v74
  %v79 = vmul.f32 %v49, %v70
  %v80 = vmul.f32 %v49, %v74
  %v81 = vmul.f32 %v54, %v70
  %v82 = vmul.f32 %v54, %v74
  %83 = vset.pattern.permute.xlu0 1
  %84 = vperm.xlu0 %83, %v25
  %v85 = vpop.permute.xlu0 %84
  %87 = vset.pattern.permute.xlu0 1
  %88 = vperm.xlu0 %87, %v26
  %v89 = vpop.permute.xlu0 %88
  %91 = vset.pattern.permute.xlu0 1
  %92 = vperm.xlu0 %91, %v27
  %v93 = vpop.permute.xlu0 %92
  %95 = vset.pattern.permute.xlu0 1
  %96 = vperm.xlu0 %95, %v28
  %v97 = vpop.permute.xlu0 %96
  %v99 = vlaneseq
  %v100 = vshrl.u32 %v99, 7
  %v101 = vsub.s32 1, %v100
  %v102 = vrot.slane %v35, %v101
  %v103 = vlaneseq
  %v104 = vshrl.u32 %v103, 7
  %v105 = vsub.s32 5, %v104
  %v106 = vrot.slane %v35, %v105
  %v109 = vlaneseq
  %v110 = vshrl.u32 %v109, 7
  %v111 = vsub.s32 1, %v110
  %v112 = vrot.slane %v102, %v111
  %v113 = vlaneseq
  %v114 = vshrl.u32 %v113, 7
  %v115 = vsub.s32 1, %v114
  %v116 = vrot.slane %v106, %v115
  %v117 = vmul.f32 %v85, %v112
  %v118 = vmul.f32 %v85, %v116
  %v119 = vmul.f32 %v89, %v112
  %v120 = vmul.f32 %v89, %v116
  %v121 = vmul.f32 %v93, %v112
  %v122 = vmul.f32 %v93, %v116
  %v123 = vmul.f32 %v97, %v112
  %v124 = vmul.f32 %v97, %v116
  %v125 = vadd.f32 %v75, %v117
  %v126 = vadd.f32 %v76, %v118
  %v127 = vadd.f32 %v77, %v119
  %v128 = vadd.f32 %v78, %v120
  %v129 = vadd.f32 %v79, %v121
  %v130 = vadd.f32 %v80, %v122
  %v131 = vadd.f32 %v81, %v123
  %v132 = vadd.f32 %v82, %v124
  %133 = vset.pattern.permute.xlu0 2
  %134 = vperm.xlu0 %133, %v25
  %v135 = vpop.permute.xlu0 %134
  %137 = vset.pattern.permute.xlu0 2
  %138 = vperm.xlu0 %137, %v26
  %v139 = vpop.permute.xlu0 %138
  %141 = vset.pattern.permute.xlu0 2
  %142 = vperm.xlu0 %141, %v27
  %v143 = vpop.permute.xlu0 %142
  %145 = vset.pattern.permute.xlu0 2
  %146 = vperm.xlu0 %145, %v28
  %v147 = vpop.permute.xlu0 %146
  %v149 = vlaneseq
  %v150 = vshrl.u32 %v149, 7
  %v151 = vsub.s32 2, %v150
  %v152 = vrot.slane %v35, %v151
  %v153 = vlaneseq
  %v154 = vshrl.u32 %v153, 7
  %v155 = vsub.s32 6, %v154
  %v156 = vrot.slane %v35, %v155
  %v159 = vlaneseq
  %v160 = vshrl.u32 %v159, 7
  %v161 = vsub.s32 2, %v160
  %v162 = vrot.slane %v152, %v161
  %v163 = vlaneseq
  %v164 = vshrl.u32 %v163, 7
  %v165 = vsub.s32 2, %v164
  %v166 = vrot.slane %v156, %v165
  %v167 = vmul.f32 %v135, %v162
  %v168 = vmul.f32 %v135, %v166
  %v169 = vmul.f32 %v139, %v162
  %v170 = vmul.f32 %v139, %v166
  %v171 = vmul.f32 %v143, %v162
  %v172 = vmul.f32 %v143, %v166
  %v173 = vmul.f32 %v147, %v162
  %v174 = vmul.f32 %v147, %v166
  %v175 = vadd.f32 %v125, %v167
  %v176 = vadd.f32 %v126, %v168
  %v177 = vadd.f32 %v127, %v169
  %v178 = vadd.f32 %v128, %v170
  %v179 = vadd.f32 %v129, %v171
  %v180 = vadd.f32 %v130, %v172
  %v181 = vadd.f32 %v131, %v173
  %v182 = vadd.f32 %v132, %v174
  %183 = vset.pattern.permute.xlu0 3
  %184 = vperm.xlu0 %183, %v25
  %v185 = vpop.permute.xlu0 %184
  %187 = vset.pattern.permute.xlu0 3
  %188 = vperm.xlu0 %187, %v26
  %v189 = vpop.permute.xlu0 %188
  %191 = vset.pattern.permute.xlu0 3
  %192 = vperm.xlu0 %191, %v27
  %v193 = vpop.permute.xlu0 %192
  %195 = vset.pattern.permute.xlu0 3
  %196 = vperm.xlu0 %195, %v28
  %v197 = vpop.permute.xlu0 %196
  %v199 = vlaneseq
  %v200 = vshrl.u32 %v199, 7
  %v201 = vsub.s32 3, %v200
  %v202 = vrot.slane %v35, %v201
  %v203 = vlaneseq
  %v204 = vshrl.u32 %v203, 7
  %v205 = vsub.s32 7, %v204
  %v206 = vrot.slane %v35, %v205
  %v209 = vlaneseq
  %v210 = vshrl.u32 %v209, 7
  %v211 = vsub.s32 3, %v210
  %v212 = vrot.slane %v202, %v211
  %v213 = vlaneseq
  %v214 = vshrl.u32 %v213, 7
  %v215 = vsub.s32 3, %v214
  %v216 = vrot.slane %v206, %v215
  %v217 = vmul.f32 %v185, %v212
  %v218 = vmul.f32 %v185, %v216
  %v219 = vmul.f32 %v189, %v212
  %v220 = vmul.f32 %v189, %v216
  %v221 = vmul.f32 %v193, %v212
  %v222 = vmul.f32 %v193, %v216
  %v223 = vmul.f32 %v197, %v212
  %v224 = vmul.f32 %v197, %v216
  %v225 = vadd.f32 %v175, %v217
  %v226 = vadd.f32 %v176, %v218
  %v227 = vadd.f32 %v177, %v219
  %v228 = vadd.f32 %v178, %v220
  %v229 = vadd.f32 %v179, %v221
  %v230 = vadd.f32 %v180, %v222
  %v231 = vadd.f32 %v181, %v223
  %v232 = vadd.f32 %v182, %v224
  %234 = vset.pattern.permute.xlu0 0
  %235 = vperm.xlu0 %234, %v29
  %v236 = vpop.permute.xlu0 %235
  %239 = vset.pattern.permute.xlu0 0
  %240 = vperm.xlu0 %239, %v30
  %v241 = vpop.permute.xlu0 %240
  %244 = vset.pattern.permute.xlu0 0
  %245 = vperm.xlu0 %244, %v31
  %v246 = vpop.permute.xlu0 %245
  %249 = vset.pattern.permute.xlu0 0
  %250 = vperm.xlu0 %249, %v32
  %v251 = vpop.permute.xlu0 %250
  %v253 = vadd.f32 %v225, %v236
  %v254 = vadd.f32 %v226, %v236
  %v255 = vadd.f32 %v227, %v241
  %v256 = vadd.f32 %v228, %v241
  %v257 = vadd.f32 %v229, %v246
  %v258 = vadd.f32 %v230, %v246
  %v259 = vadd.f32 %v231, %v251
  %v260 = vadd.f32 %v232, %v251
  %v261 = vmax.f32 %v253, 0.0
  %v262 = vmax.f32 %v254, 0.0
  %v263 = vmax.f32 %v255, 0.0
  %v264 = vmax.f32 %v256, 0.0
  %v265 = vmax.f32 %v257, 0.0
  %v266 = vmax.f32 %v258, 0.0
  %v267 = vmax.f32 %v259, 0.0
  %v268 = vmax.f32 %v260, 0.0
  %269 = vmatprep.subr.mxu0 0.0
  %270 = vmatpush1.xpose.msra.mxu0 0.0
  %271 = vmatprep.subr.mxu0 0.0
  %272 = vmatpush1.xpose.msra.mxu0 0.0
  %273 = vmatprep.subr.mxu0 0.0
  %274 = vmatpush1.xpose.msra.mxu0 0.0
  %275 = vmatprep.subr.mxu0 0.0
  %276 = vmatpush1.xpose.msra.mxu0 0.0
  %277 = vmatprep.subr.mxu0 0.0
  %278 = vmatpush1.xpose.msra.mxu0 0.0
  %279 = vmatprep.subr.mxu0 0.0
  %280 = vmatpush1.xpose.msra.mxu0 0.0
  %281 = vmatprep.subr.mxu0 0.0
  %282 = vmatpush1.xpose.msra.mxu0 0.0
  %283 = vmatprep.subr.mxu0 0.0
  %284 = vmatpush1.xpose.msra.mxu0 0.0
  %285 = vmatprep.subr.mxu0 0.0
  %286 = vmatpush1.xpose.msra.mxu0 0.0
  %287 = vmatprep.subr.mxu0 0.0
  %288 = vmatpush1.xpose.msra.mxu0 0.0
  %289 = vmatprep.subr.mxu0 0.0
  %290 = vmatpush1.xpose.msra.mxu0 0.0
  %291 = vmatprep.subr.mxu0 0.0
  %292 = vmatpush1.xpose.msra.mxu0 0.0
  %293 = vmatprep.subr.mxu0 %v268
  %294 = vmatpush1.xpose.msra.mxu0 %v267
  %295 = vmatprep.subr.mxu0 %v266
  %296 = vmatpush1.xpose.msra.mxu0 %v265
  %297 = vmatprep.subr.mxu0 %v264
  %298 = vmatpush1.xpose.msra.mxu0 %v263
  %299 = vmatprep.subr.mxu0 %v262
  %300 = vmatpush1.xpose.msra.mxu0 %v261
  %301 = vmatprep.subr.mxu0 0.0
  %302 = vmatpush2.xpose.msra.mxu0 0.0
  %303 = vmatprep.subr.mxu0 0.0
  %304 = vmatpush2.xpose.msra.mxu0 0.0
  %305 = vmatprep.subr.mxu0 0.0
  %306 = vmatpush2.xpose.msra.mxu0 0.0
  %307 = vmatprep.subr.mxu0 0.0
  %308 = vmatpush2.xpose.msra.mxu0 0.0
  %309 = vmatprep.subr.mxu0 0.0
  %310 = vmatpush2.xpose.msra.mxu0 0.0
  %311 = vmatprep.subr.mxu0 0.0
  %312 = vmatpush2.xpose.msra.mxu0 0.0
  %313 = vmatprep.subr.mxu0 0.0
  %314 = vmatpush2.xpose.msra.mxu0 0.0
  %315 = vmatprep.subr.mxu0 0.0
  %316 = vmatpush2.xpose.msra.mxu0 0.0
  %317 = vmatprep.subr.mxu0 0.0
  %318 = vmatpush2.xpose.msra.mxu0 0.0
  %319 = vmatprep.subr.mxu0 0.0
  %320 = vmatpush2.xpose.msra.mxu0 0.0
  %321 = vmatprep.subr.mxu0 0.0
  %322 = vmatpush2.xpose.msra.mxu0 0.0
  %323 = vmatprep.subr.mxu0 0.0
  %324 = vmatpush2.xpose.msra.mxu0 0.0
  %325 = vmatprep.subr.mxu0 0.0
  %326 = vmatpush2.xpose.msra.mxu0 0.0
  %327 = vmatprep.subr.mxu0 0.0
  %328 = vmatpush2.xpose.msra.mxu0 0.0
  %329 = vmatprep.subr.mxu0 0.0
  %330 = vmatpush2.xpose.msra.mxu0 0.0
  %331 = vmatprep.subr.mxu0 0.0
  %332 = vmatpush2.xpose.msra.mxu0 0.0
  %333 = vmatprep.mubr.f32.mxu0 %v24
  %334 = vmatmul.mubr.f32.gmra.mxu0 %v23
  %v335 = vpop.f32.mrf.mxu0
  %v336 = vadd.f32 0.0, %v335
  %v337 = vpop.f32.mrf.mxu0
  %338 = vdwg.mxu0
  %v339 = vmul.f32 %v336, %v33
  %vm340 = vcmask 261120
  %v341 = vsel %vm340, %v339, 0.0
  %342 = vadd.xlane.f32.xlu0 %v341
  %v343 = vpop.xlane.xlu0 %342
  %v344 = vadd.f32 %v343, %v34
  %vm345 = vcmask 7168
  %v346 = vsel %vm345, %v344, -inf
  %v347 = vrot.slane %v346, 4
  %v348 = vmax.f32 %v346, %v347
  %v349 = vrot.slane %v348, 2
  %v350 = vmax.f32 %v348, %v349
  %v351 = vrot.slane %v350, 1
  %v352 = vmax.f32 %v350, %v351
  %v353 = vsub.f32 %v344, %v352
  %v354 = vmul.f32 %v353, 1.442695
  %v355 = vpow.pop %v354
  %v356 = vsel %vm345, %v355, 0.0
  %v357 = vrot.slane %v356, 4
  %v358 = vadd.f32 %v356, %v357
  %v359 = vrot.slane %v358, 2
  %v360 = vadd.f32 %v358, %v359
  %v361 = vrot.slane %v360, 1
  %v362 = vadd.f32 %v360, %v361
  %v363 = vrcp.pop %v362
  %v364 = vmul.f32 %v355, %v363
  %365 = vst.msk [vmem:[%s6] sm:$0xff] %vm345, %v364
  %s366 = scalar_lea.vmem %s1, 8
  %v367 = vld [vmem:[%s366] sm:$0xff]
  %v369 = vlaneseq
  %v370 = vshrl.u32 %v369, 7
  %v371 = vsub.s32 0, %v370
  %v372 = vrot.slane %v367, %v371
  %v373 = vlaneseq
  %v374 = vshrl.u32 %v373, 7
  %v375 = vsub.s32 4, %v374
  %v376 = vrot.slane %v367, %v375
  %v379 = vlaneseq
  %v380 = vshrl.u32 %v379, 7
  %v381 = vsub.s32 0, %v380
  %v382 = vrot.slane %v372, %v381
  %v383 = vlaneseq
  %v384 = vshrl.u32 %v383, 7
  %v385 = vsub.s32 0, %v384
  %v386 = vrot.slane %v376, %v385
  %v387 = vmul.f32 %v39, %v382
  %v388 = vmul.f32 %v39, %v386
  %v389 = vmul.f32 %v44, %v382
  %v390 = vmul.f32 %v44, %v386
  %v391 = vmul.f32 %v49, %v382
  %v392 = vmul.f32 %v49, %v386
  %v393 = vmul.f32 %v54, %v382
  %v394 = vmul.f32 %v54, %v386
  %v395 = vlaneseq
  %v396 = vshrl.u32 %v395, 7
  %v397 = vsub.s32 1, %v396
  %v398 = vrot.slane %v367, %v397
  %v399 = vlaneseq
  %v400 = vshrl.u32 %v399, 7
  %v401 = vsub.s32 5, %v400
  %v402 = vrot.slane %v367, %v401
  %v405 = vlaneseq
  %v406 = vshrl.u32 %v405, 7
  %v407 = vsub.s32 1, %v406
  %v408 = vrot.slane %v398, %v407
  %v409 = vlaneseq
  %v410 = vshrl.u32 %v409, 7
  %v411 = vsub.s32 1, %v410
  %v412 = vrot.slane %v402, %v411
  %v413 = vmul.f32 %v85, %v408
  %v414 = vmul.f32 %v85, %v412
  %v415 = vmul.f32 %v89, %v408
  %v416 = vmul.f32 %v89, %v412
  %v417 = vmul.f32 %v93, %v408
  %v418 = vmul.f32 %v93, %v412
  %v419 = vmul.f32 %v97, %v408
  %v420 = vmul.f32 %v97, %v412
  %v421 = vadd.f32 %v387, %v413
  %v422 = vadd.f32 %v388, %v414
  %v423 = vadd.f32 %v389, %v415
  %v424 = vadd.f32 %v390, %v416
  %v425 = vadd.f32 %v391, %v417
  %v426 = vadd.f32 %v392, %v418
  %v427 = vadd.f32 %v393, %v419
  %v428 = vadd.f32 %v394, %v420
  %v429 = vlaneseq
  %v430 = vshrl.u32 %v429, 7
  %v431 = vsub.s32 2, %v430
  %v432 = vrot.slane %v367, %v431
  %v433 = vlaneseq
  %v434 = vshrl.u32 %v433, 7
  %v435 = vsub.s32 6, %v434
  %v436 = vrot.slane %v367, %v435
  %v439 = vlaneseq
  %v440 = vshrl.u32 %v439, 7
  %v441 = vsub.s32 2, %v440
  %v442 = vrot.slane %v432, %v441
  %v443 = vlaneseq
  %v444 = vshrl.u32 %v443, 7
  %v445 = vsub.s32 2, %v444
  %v446 = vrot.slane %v436, %v445
  %v447 = vmul.f32 %v135, %v442
  %v448 = vmul.f32 %v135, %v446
  %v449 = vmul.f32 %v139, %v442
  %v450 = vmul.f32 %v139, %v446
  %v451 = vmul.f32 %v143, %v442
  %v452 = vmul.f32 %v143, %v446
  %v453 = vmul.f32 %v147, %v442
  %v454 = vmul.f32 %v147, %v446
  %v455 = vadd.f32 %v421, %v447
  %v456 = vadd.f32 %v422, %v448
  %v457 = vadd.f32 %v423, %v449
  %v458 = vadd.f32 %v424, %v450
  %v459 = vadd.f32 %v425, %v451
  %v460 = vadd.f32 %v426, %v452
  %v461 = vadd.f32 %v427, %v453
  %v462 = vadd.f32 %v428, %v454
  %v463 = vlaneseq
  %v464 = vshrl.u32 %v463, 7
  %v465 = vsub.s32 3, %v464
  %v466 = vrot.slane %v367, %v465
  %v467 = vlaneseq
  %v468 = vshrl.u32 %v467, 7
  %v469 = vsub.s32 7, %v468
  %v470 = vrot.slane %v367, %v469
  %v473 = vlaneseq
  %v474 = vshrl.u32 %v473, 7
  %v475 = vsub.s32 3, %v474
  %v476 = vrot.slane %v466, %v475
  %v477 = vlaneseq
  %v478 = vshrl.u32 %v477, 7
  %v479 = vsub.s32 3, %v478
  %v480 = vrot.slane %v470, %v479
  %v481 = vmul.f32 %v185, %v476
  %v482 = vmul.f32 %v185, %v480
  %v483 = vmul.f32 %v189, %v476
  %v484 = vmul.f32 %v189, %v480
  %v485 = vmul.f32 %v193, %v476
  %v486 = vmul.f32 %v193, %v480
  %v487 = vmul.f32 %v197, %v476
  %v488 = vmul.f32 %v197, %v480
  %v489 = vadd.f32 %v455, %v481
  %v490 = vadd.f32 %v456, %v482
  %v491 = vadd.f32 %v457, %v483
  %v492 = vadd.f32 %v458, %v484
  %v493 = vadd.f32 %v459, %v485
  %v494 = vadd.f32 %v460, %v486
  %v495 = vadd.f32 %v461, %v487
  %v496 = vadd.f32 %v462, %v488
  %v497 = vadd.f32 %v489, %v236
  %v498 = vadd.f32 %v490, %v236
  %v499 = vadd.f32 %v491, %v241
  %v500 = vadd.f32 %v492, %v241
  %v501 = vadd.f32 %v493, %v246
  %v502 = vadd.f32 %v494, %v246
  %v503 = vadd.f32 %v495, %v251
  %v504 = vadd.f32 %v496, %v251
  %v505 = vmax.f32 %v497, 0.0
  %v506 = vmax.f32 %v498, 0.0
  %v507 = vmax.f32 %v499, 0.0
  %v508 = vmax.f32 %v500, 0.0
  %v509 = vmax.f32 %v501, 0.0
  %v510 = vmax.f32 %v502, 0.0
  %v511 = vmax.f32 %v503, 0.0
  %v512 = vmax.f32 %v504, 0.0
  %513 = vmatprep.subr.mxu0 0.0
  %514 = vmatpush1.xpose.msra.mxu0 0.0
  %515 = vmatprep.subr.mxu0 0.0
  %516 = vmatpush1.xpose.msra.mxu0 0.0
  %517 = vmatprep.subr.mxu0 0.0
  %518 = vmatpush1.xpose.msra.mxu0 0.0
  %519 = vmatprep.subr.mxu0 0.0
  %520 = vmatpush1.xpose.msra.mxu0 0.0
  %521 = vmatprep.subr.mxu0 0.0
  %522 = vmatpush1.xpose.msra.mxu0 0.0
  %523 = vmatprep.subr.mxu0 0.0
  %524 = vmatpush1.xpose.msra.mxu0 0.0
  %525 = vmatprep.subr.mxu0 0.0
  %526 = vmatpush1.xpose.msra.mxu0 0.0
  %527 = vmatprep.subr.mxu0 0.0
  %528 = vmatpush1.xpose.msra.mxu0 0.0
  %529 = vmatprep.subr.mxu0 0.0
  %530 = vmatpush1.xpose.msra.mxu0 0.0
  %531 = vmatprep.subr.mxu0 0.0
  %532 = vmatpush1.xpose.msra.mxu0 0.0
  %533 = vmatprep.subr.mxu0 0.0
  %534 = vmatpush1.xpose.msra.mxu0 0.0
  %535 = vmatprep.subr.mxu0 0.0
  %536 = vmatpush1.xpose.msra.mxu0 0.0
  %537 = vmatprep.subr.mxu0 %v512
  %538 = vmatpush1.xpose.msra.mxu0 %v511
  %539 = vmatprep.subr.mxu0 %v510
  %540 = vmatpush1.xpose.msra.mxu0 %v509
  %541 = vmatprep.subr.mxu0 %v508
  %542 = vmatpush1.xpose.msra.mxu0 %v507
  %543 = vmatprep.subr.mxu0 %v506
  %544 = vmatpush1.xpose.msra.mxu0 %v505
  %545 = vmatprep.subr.mxu0 0.0
  %546 = vmatpush2.xpose.msra.mxu0 0.0
  %547 = vmatprep.subr.mxu0 0.0
  %548 = vmatpush2.xpose.msra.mxu0 0.0
  %549 = vmatprep.subr.mxu0 0.0
  %550 = vmatpush2.xpose.msra.mxu0 0.0
  %551 = vmatprep.subr.mxu0 0.0
  %552 = vmatpush2.xpose.msra.mxu0 0.0
  %553 = vmatprep.subr.mxu0 0.0
  %554 = vmatpush2.xpose.msra.mxu0 0.0
  %555 = vmatprep.subr.mxu0 0.0
  %556 = vmatpush2.xpose.msra.mxu0 0.0
  %557 = vmatprep.subr.mxu0 0.0
  %558 = vmatpush2.xpose.msra.mxu0 0.0
  %559 = vmatprep.subr.mxu0 0.0
  %560 = vmatpush2.xpose.msra.mxu0 0.0
  %561 = vmatprep.subr.mxu0 0.0
  %562 = vmatpush2.xpose.msra.mxu0 0.0
  %563 = vmatprep.subr.mxu0 0.0
  %564 = vmatpush2.xpose.msra.mxu0 0.0
  %565 = vmatprep.subr.mxu0 0.0
  %566 = vmatpush2.xpose.msra.mxu0 0.0
  %567 = vmatprep.subr.mxu0 0.0
  %568 = vmatpush2.xpose.msra.mxu0 0.0
  %569 = vmatprep.subr.mxu0 0.0
  %570 = vmatpush2.xpose.msra.mxu0 0.0
  %571 = vmatprep.subr.mxu0 0.0
  %572 = vmatpush2.xpose.msra.mxu0 0.0
  %573 = vmatprep.subr.mxu0 0.0
  %574 = vmatpush2.xpose.msra.mxu0 0.0
  %575 = vmatprep.subr.mxu0 0.0
  %576 = vmatpush2.xpose.msra.mxu0 0.0
  %577 = vmatprep.mubr.f32.mxu0 %v24
  %578 = vmatmul.mubr.f32.gmra.mxu0 %v23
  %v579 = vpop.f32.mrf.mxu0
  %v580 = vadd.f32 0.0, %v579
  %v581 = vpop.f32.mrf.mxu0
  %582 = vdwg.mxu0
  %v583 = vmul.f32 %v580, %v33
  %v584 = vsel %vm340, %v583, 0.0
  %585 = vadd.xlane.f32.xlu0 %v584
  %v586 = vpop.xlane.xlu0 %585
  %v587 = vadd.f32 %v586, %v34
  %v588 = vsel %vm345, %v587, -inf
  %v589 = vrot.slane %v588, 4
  %v590 = vmax.f32 %v588, %v589
  %v591 = vrot.slane %v590, 2
  %v592 = vmax.f32 %v590, %v591
  %v593 = vrot.slane %v592, 1
  %v594 = vmax.f32 %v592, %v593
  %v595 = vsub.f32 %v587, %v594
  %v596 = vmul.f32 %v595, 1.442695
  %v597 = vpow.pop %v596
  %v598 = vsel %vm345, %v597, 0.0
  %v599 = vrot.slane %v598, 4
  %v600 = vadd.f32 %v598, %v599
  %v601 = vrot.slane %v600, 2
  %v602 = vadd.f32 %v600, %v601
  %v603 = vrot.slane %v602, 1
  %v604 = vadd.f32 %v602, %v603
  %v605 = vrcp.pop %v604
  %v606 = vmul.f32 %v597, %v605
  %s607 = scalar_lea.vmem %s6, 8
  %608 = vst.msk [vmem:[%s607] sm:$0xff] %vm345, %v606
  // Predicated region
  $region26: #{gaussian_attention_cluster_forward.3} parent=0 // pred_check
    _
  $region27: #{gaussian_attention_cluster_forward.3} parent=0 // pred_check_branch
    %610 = sbr.rel (0) target = $region29
  $region28: #{gaussian_attention_cluster_forward.3} parent=0 // pred_region
    _
  $region29: #{gaussian_attention_cluster_forward.3} parent=0 // pred_fallthru
    _
  // Predicated region
  $region30: #{gaussian_attention_cluster_forward.3} parent=0 // pred_check
    _
  $region31: #{gaussian_attention_cluster_forward.3} parent=0 // pred_check_branch
    %612 = sbr.rel (0) target = $region33
  $region32: #{gaussian_attention_cluster_forward.3} parent=0 // pred_region
    _
  $region33: #{gaussian_attention_cluster_forward.3} parent=0 // pred_fallthru
    _

</llo_original>
